<compile_context>
chip_gen: v7x
topology: tpu7x:2x2x1
jax: 0.10.0
libtpu: 0.0.40
codegen_flags: <defaults>
</compile_context>

<pallas_src>
import functools

import jax
import jax.numpy as jnp
from jax.experimental import pallas as pl
from jax.experimental.pallas import tpu as pltpu


def _mlp_kernel(x_ref, w1_ref, b1_ref, w2_ref, b2_ref, o_ref):
    """One row tile of relu(x @ W1 + b1) @ W2 + b2 with f32 MXU accumulation."""
    h = jnp.dot(x_ref[...], w1_ref[...], preferred_element_type=jnp.float32)
    h = h + b1_ref[...].astype(jnp.float32)
    h = jnp.maximum(h, 0.0)                                   # ReLU on the VPU
    out = jnp.dot(h.astype(w2_ref.dtype), w2_ref[...],
                  preferred_element_type=jnp.float32)
    out = out + b2_ref[...].astype(jnp.float32)
    o_ref[...] = out.astype(o_ref.dtype)


def _round_up(a, b):
    return pl.cdiv(a, b) * b


def _device_kind():
    try:
        return jax.devices()[0].device_kind.lower()
    except Exception:
        return ""


def _sublane_rows(dtype):
    # (8,128) tiling packs sub-32-bit dtypes along sublanes:
    # 8 rows for 4-byte, 16 for 2-byte, 32 for 1-byte dtypes.
    return max(8, 32 // jnp.dtype(dtype).itemsize)


def _resident_spec(shape, single_buffer):
    """BlockSpec for an operand that is identical for every grid step."""
    index_map = lambda i: (0, 0)
    if single_buffer:
        buffered = getattr(pl, "Buffered", None)
        if buffered is not None:
            try:
                # Constant index_map => block never changes; one VMEM copy is
                # enough (default double-buffering only burns VMEM).
                return pl.BlockSpec(shape, index_map, pipeline_mode=buffered(1))
            except TypeError:
                pass
    return pl.BlockSpec(shape, index_map)


def _vmem_bytes_estimate(tile_m, in_dim, out_pad, io_sz, w_sz, weight_buffers):
    xb = 2 * tile_m * in_dim * io_sz                 # double-buffered x tile
    ob = 2 * tile_m * out_pad * io_sz                # double-buffered out tile
    wb = weight_buffers * (in_dim * in_dim + in_dim
                           + in_dim * out_pad + out_pad) * w_sz
    hb = tile_m * (in_dim + out_pad) * 4             # f32 intermediates
    return xb + ob + wb + hb


def additional_input_forward(x, w1, b1, w2, b2, *, tile_m=None, use_pallas=None,
                             mxu_dtype=None):
    """out = relu(x @ w1 + b1) @ w2 + b2.

    x: [M, in_dim], w1: [in_dim, in_dim], b1: [in_dim],
    w2: [in_dim, out_dim], b2: [out_dim]  ->  [M, out_dim]
    (Weights use x @ W convention, i.e. transposed vs. nn.Linear.weight.)
    """
    M, in_dim = x.shape
    assert w1.shape == (in_dim, in_dim)
    assert b1.shape == (in_dim,)
    assert w2.shape[0] == in_dim
    out_dim = w2.shape[1]
    assert b2.shape == (out_dim,)

    # Tiny feature dims underutilize lanes / the MXU (e.g. 32 of 128 lanes);
    # XLA's fused dot wins there.  Callers can force the Pallas path.
    if use_pallas is None:
        use_pallas = in_dim >= 128 and M >= _sublane_rows(x.dtype)
    if not use_pallas:
        return (jnp.maximum(x @ w1 + b1, 0.0) @ w2 + b2).astype(x.dtype)

    kind = _device_kind()
    is_v7 = "v7" in kind

    out_dtype = x.dtype
    # On v5e, pass mxu_dtype=jnp.bfloat16 if precision allows: f32 matmul is
    # multi-pass on its 4x128^2 MXU and bf16 halves activation HBM traffic.
    compute_dtype = jnp.dtype(mxu_dtype) if mxu_dtype is not None else jnp.dtype(x.dtype)

    # Lane-dense output: pad out_dim to a multiple of 128 (full `vst` stores,
    # no masked partial stores).  This only pads weights, not activations.
    out_pad = int(_round_up(out_dim, 128))
    w2p = w2 if out_pad == out_dim else jnp.pad(w2, ((0, 0), (0, out_pad - out_dim)))
    b2p = b2 if out_pad == out_dim else jnp.pad(b2, (0, out_pad - out_dim))

    xk = x.astype(compute_dtype)
    w1k = w1.astype(compute_dtype)
    w2k = w2p.astype(compute_dtype)
    b1_2d = b1.astype(jnp.float32).reshape(1, in_dim)
    b2_2d = b2p.astype(jnp.float32).reshape(1, out_pad)

    io_sz = jnp.dtype(compute_dtype).itemsize
    w_sz = io_sz
    sub = _sublane_rows(compute_dtype)

    # VMEM budget: v7x has 64 MiB/core -> leave headroom; v5e/v6e have 128 MiB
    # physical, so the old 64 MiB cap was an artificial ceiling.
    vmem_budget = (48 << 20) if is_v7 else (100 << 20)

    w_bytes = (in_dim * in_dim + in_dim + in_dim * out_pad + out_pad) * w_sz
    if _vmem_bytes_estimate(sub, in_dim, out_pad, io_sz, w_sz, 1) > vmem_budget:
        # TODO(synk): add a hidden/K grid axis ("arbitrary", last) with a VMEM
        # f32 accumulator + pl.when init/finalize so resident weights no longer
        # have to fit VMEM in one piece for very large in_dim.
        raise ValueError(
            f"AdditionalInputLayer Pallas kernel: resident weights "
            f"(~{w_bytes / 2**20:.1f} MiB) do not fit the VMEM budget "
            f"({vmem_budget / 2**20:.0f} MiB) even at the minimum row tile; "
            f"in_dim={in_dim} is too large for this single-axis kernel.")

    def pick_tile_m(weight_buffers):
        t = 512 if tile_m is None else int(tile_m)
        t = max(sub, (t // sub) * sub)                 # sublane-aligned
        t = min(t, int(_round_up(M, sub)))             # never exceed (padded) M
        while t > sub and _vmem_bytes_estimate(
                t, in_dim, out_pad, io_sz, w_sz, weight_buffers) > vmem_budget:
            t = max(sub, t // 2)
        return t

    # v7x has 2 TensorCores per chip: CORE_PARALLEL shards the row tiles across
    # both.  Plain "parallel" elsewhere (single TC per chip).
    row_sem = getattr(pltpu, "CORE_PARALLEL", "parallel") if is_v7 else "parallel"

    flops = 2 * M * in_dim * (in_dim + out_pad)
    bytes_accessed = M * in_dim * io_sz + w_bytes + M * out_pad * io_sz

    def launch(single_buffer_weights):
        tm = pick_tile_m(1 if single_buffer_weights else 2)
        # Ragged final row tile: grid = cdiv(M, tm); Pallas masks out-of-bounds
        # rows, so no jnp.pad / extra HBM round trip of the activations.
        grid = (pl.cdiv(M, tm),)
        resident = functools.partial(_resident_spec,
                                     single_buffer=single_buffer_weights)
        return pl.pallas_call(
            _mlp_kernel,
            out_shape=jax.ShapeDtypeStruct((M, out_pad), out_dtype),
            grid_spec=pltpu.PrefetchScalarGridSpec(
                num_scalar_prefetch=0,
                grid=grid,
                in_specs=[
                    # x tiled over rows; weights/biases resident (one copy).
                    pl.BlockSpec((tm, in_dim), lambda i: (i, 0)),
                    resident((in_dim, in_dim)),
                    resident((1, in_dim)),
                    resident((in_dim, out_pad)),
                    resident((1, out_pad)),
                ],
                out_specs=pl.BlockSpec((tm, out_pad), lambda i: (i, 0)),
            ),
            compiler_params=pltpu.CompilerParams(
                dimension_semantics=(row_sem,),
                vmem_limit_bytes=int(vmem_budget),
            ),
            cost_estimate=pl.CostEstimate(
                flops=int(flops), transcendentals=0,
                bytes_accessed=int(bytes_accessed)),
        )(xk, w1k, b1_2d, w2k, b2_2d)

    try:
        out = launch(single_buffer_weights=True)
    except Exception:
        # Fallback for jax/Mosaic builds where pipeline_mode=pl.Buffered(1) is
        # not supported: use default (double) buffering for the weights.
        out = launch(single_buffer_weights=False)

    if out_pad != out_dim:
        out = out[:, :out_dim]
    return out


if __name__ == "__main__":
    key = jax.random.PRNGKey(0)
    kx, k1, kb1, k2, kb2 = jax.random.split(key, 5)

    batch, in_dim, out_dim = 8, 32, 32
    x = jax.random.normal(kx, (batch, in_dim), dtype=jnp.float32)
    # Random (non-zero) weights/biases so both matmuls, the bias adds and the
    # ReLU are actually exercised.
    w1 = jax.random.normal(k1, (in_dim, in_dim), dtype=jnp.float32) / jnp.sqrt(in_dim)
    b1 = jax.random.normal(kb1, (in_dim,), dtype=jnp.float32) * 0.1
    w2 = jax.random.normal(k2, (in_dim, out_dim), dtype=jnp.float32) / jnp.sqrt(in_dim)
    b2 = jax.random.normal(kb2, (out_dim,), dtype=jnp.float32) * 0.1

    # use_pallas=True forces the kernel path even at these tiny feature dims
    # (the auto heuristic would route 32-wide features to plain XLA).
    out = additional_input_forward(x, w1, b1, w2, b2, use_pallas=True)
    out = jax.block_until_ready(out)

    # Reference in plain JAX (same semantics as the PyTorch module).
    ref = jnp.maximum(x @ w1 + b1, 0.0) @ w2 + b2
    assert out.shape == (batch, out_dim)
    assert jnp.allclose(out, ref, atol=1e-3, rtol=1e-3)

    print("KERNEL_OK")
</pallas_src>

<mosaic_0001>
module attributes {stable_mosaic.version = 11 : i64} {
  func.func @_mlp_kernel(%arg0: i32, %arg1: memref<8x32xf32, #tpu.memory_space<vmem>>, %arg2: memref<32x32xf32, #tpu.memory_space<vmem>>, %arg3: memref<1x32xf32, #tpu.memory_space<vmem>>, %arg4: memref<32x128xf32, #tpu.memory_space<vmem>>, %arg5: memref<1x128xf32, #tpu.memory_space<vmem>>, %arg6: memref<8x128xf32, #tpu.memory_space<vmem>>) attributes {dimension_semantics = [#tpu.dimension_semantics<parallel>], iteration_bounds = array<i64: 1>, scalar_prefetch = 0 : i64, scratch_operands = 0 : i64, tpu.core_type = #tpu.core_type<tc>, window_params = [{transform_indices = @transform_0, window_bounds = array<i64: 8, 32>}, {pipeline_mode = #tpu.pipeline_mode<synchronous>, transform_indices = @transform_1, window_bounds = array<i64: 32, 32>}, {pipeline_mode = #tpu.pipeline_mode<synchronous>, transform_indices = @transform_2, window_bounds = array<i64: 1, 32>}, {pipeline_mode = #tpu.pipeline_mode<synchronous>, transform_indices = @transform_3, window_bounds = array<i64: 32, 128>}, {pipeline_mode = #tpu.pipeline_mode<synchronous>, transform_indices = @transform_4, window_bounds = array<i64: 1, 128>}, {transform_indices = @transform_5, window_bounds = array<i64: 8, 128>}]} {
    %c0 = arith.constant 0 : index
    %c0_0 = arith.constant 0 : index
    %0 = vector.load %arg1[%c0, %c0_0] : memref<8x32xf32, #tpu.memory_space<vmem>>, vector<8x32xf32>
    %c0_1 = arith.constant 0 : index
    %c0_2 = arith.constant 0 : index
    %1 = vector.load %arg2[%c0_1, %c0_2] : memref<32x32xf32, #tpu.memory_space<vmem>>, vector<32x32xf32>
    %cst = arith.constant dense<0.000000e+00> : vector<8x32xf32>
    %2 = tpu.matmul %0, %1, %cst {dimension_numbers = #tpu.dot_dimension_numbers<[1], [0], [0], [1], [0, 0, 1, 1], [], []>} : vector<8x32xf32>, vector<32x32xf32>, vector<8x32xf32> -> vector<8x32xf32>
    %c0_3 = arith.constant 0 : index
    %c0_4 = arith.constant 0 : index
    %3 = vector.load %arg3[%c0_3, %c0_4] : memref<1x32xf32, #tpu.memory_space<vmem>>, vector<1x32xf32>
    %4 = vector.broadcast %3 : vector<1x32xf32> to vector<8x32xf32>
    %5 = arith.addf %2, %4 : vector<8x32xf32>
    %cst_5 = arith.constant 0.000000e+00 : f32
    %6 = vector.broadcast %cst_5 : f32 to vector<8x32xf32>
    %7 = arith.maximumf %5, %6 : vector<8x32xf32>
    %c0_6 = arith.constant 0 : index
    %c0_7 = arith.constant 0 : index
    %8 = vector.load %arg4[%c0_6, %c0_7] : memref<32x128xf32, #tpu.memory_space<vmem>>, vector<32x128xf32>
    %cst_8 = arith.constant dense<0.000000e+00> : vector<8x128xf32>
    %9 = tpu.matmul %7, %8, %cst_8 {dimension_numbers = #tpu.dot_dimension_numbers<[1], [0], [0], [1], [0, 0, 1, 1], [], []>} : vector<8x32xf32>, vector<32x128xf32>, vector<8x128xf32> -> vector<8x128xf32>
    %c0_9 = arith.constant 0 : index
    %c0_10 = arith.constant 0 : index
    %10 = vector.load %arg5[%c0_9, %c0_10] : memref<1x128xf32, #tpu.memory_space<vmem>>, vector<1x128xf32>
    %11 = vector.broadcast %10 : vector<1x128xf32> to vector<8x128xf32>
    %12 = arith.addf %9, %11 : vector<8x128xf32>
    %c0_11 = arith.constant 0 : index
    %c0_12 = arith.constant 0 : index
    %13 = vector.load %arg6[%c0_11, %c0_12] : memref<8x128xf32, #tpu.memory_space<vmem>>, vector<8x128xf32>
    tpu.vector_store %arg6[%c0_11, %c0_12], %12 {strides = array<i32>} : memref<8x128xf32, #tpu.memory_space<vmem>>, vector<8x128xf32>,
    return
  }
  func.func @transform_0(%arg0: i32) -> (i32, i32) {
    %c0_i32 = arith.constant 0 : i32
    %c0_i32_0 = arith.constant 0 : i32
    return %arg0, %c0_i32 : i32, i32
  }
  func.func @transform_1(%arg0: i32) -> (i32, i32) {
    %c0_i32 = arith.constant 0 : i32
    %c0_i32_0 = arith.constant 0 : i32
    %c0_i32_1 = arith.constant 0 : i32
    return %c0_i32, %c0_i32_0 : i32, i32
  }
  func.func @transform_2(%arg0: i32) -> (i32, i32) {
    %c0_i32 = arith.constant 0 : i32
    %c0_i32_0 = arith.constant 0 : i32
    %c0_i32_1 = arith.constant 0 : i32
    return %c0_i32, %c0_i32_0 : i32, i32
  }
  func.func @transform_3(%arg0: i32) -> (i32, i32) {
    %c0_i32 = arith.constant 0 : i32
    %c0_i32_0 = arith.constant 0 : i32
    %c0_i32_1 = arith.constant 0 : i32
    return %c0_i32, %c0_i32_0 : i32, i32
  }
  func.func @transform_4(%arg0: i32) -> (i32, i32) {
    %c0_i32 = arith.constant 0 : i32
    %c0_i32_0 = arith.constant 0 : i32
    %c0_i32_1 = arith.constant 0 : i32
    return %c0_i32, %c0_i32_0 : i32, i32
  }
  func.func @transform_5(%arg0: i32) -> (i32, i32) {
    %c0_i32 = arith.constant 0 : i32
    %c0_i32_0 = arith.constant 0 : i32
    return %arg0, %c0_i32 : i32, i32
  }
}

module attributes {stable_mosaic.version = 11 : i64} {
  func.func @_mlp_kernel(%arg0: i32, %arg1: memref<8x32xf32, #tpu.memory_space<vmem>>, %arg2: memref<32x32xf32, #tpu.memory_space<vmem>>, %arg3: memref<1x32xf32, #tpu.memory_space<vmem>>, %arg4: memref<32x128xf32, #tpu.memory_space<vmem>>, %arg5: memref<1x128xf32, #tpu.memory_space<vmem>>, %arg6: memref<8x128xf32, #tpu.memory_space<vmem>>) attributes {dimension_semantics = [#tpu.dimension_semantics<parallel>], iteration_bounds = array<i64: 1>, scalar_prefetch = 0 : i64, scratch_operands = 0 : i64, tpu.core_type = #tpu.core_type<tc>, window_params = [{transform_indices = @transform_0, window_bounds = array<i64: 8, 32>}, {pipeline_mode = #tpu.pipeline_mode<synchronous>, transform_indices = @transform_1, window_bounds = array<i64: 32, 32>}, {pipeline_mode = #tpu.pipeline_mode<synchronous>, transform_indices = @transform_2, window_bounds = array<i64: 1, 32>}, {pipeline_mode = #tpu.pipeline_mode<synchronous>, transform_indices = @transform_3, window_bounds = array<i64: 32, 128>}, {pipeline_mode = #tpu.pipeline_mode<synchronous>, transform_indices = @transform_4, window_bounds = array<i64: 1, 128>}, {transform_indices = @transform_5, window_bounds = array<i64: 8, 128>}]} {
    %c0 = arith.constant 0 : index
    %c0_0 = arith.constant 0 : index
    %0 = vector.load %arg1[%c0, %c0_0] : memref<8x32xf32, #tpu.memory_space<vmem>>, vector<8x32xf32>
    %c0_1 = arith.constant 0 : index
    %c0_2 = arith.constant 0 : index
    %1 = vector.load %arg2[%c0_1, %c0_2] : memref<32x32xf32, #tpu.memory_space<vmem>>, vector<32x32xf32>
    %cst = arith.constant dense<0.000000e+00> : vector<8x32xf32>
    %2 = tpu.matmul %0, %1, %cst {dimension_numbers = #tpu.dot_dimension_numbers<[1], [0], [0], [1], [0, 0, 1, 1], [], []>} : vector<8x32xf32>, vector<32x32xf32>, vector<8x32xf32> -> vector<8x32xf32>
    %c0_3 = arith.constant 0 : index
    %c0_4 = arith.constant 0 : index
    %3 = vector.load %arg3[%c0_3, %c0_4] : memref<1x32xf32, #tpu.memory_space<vmem>>, vector<1x32xf32>
    %4 = vector.broadcast %3 : vector<1x32xf32> to vector<8x32xf32>
    %5 = arith.addf %2, %4 : vector<8x32xf32>
    %cst_5 = arith.constant 0.000000e+00 : f32
    %6 = vector.broadcast %cst_5 : f32 to vector<8x32xf32>
    %7 = arith.maximumf %5, %6 : vector<8x32xf32>
    %c0_6 = arith.constant 0 : index
    %c0_7 = arith.constant 0 : index
    %8 = vector.load %arg4[%c0_6, %c0_7] : memref<32x128xf32, #tpu.memory_space<vmem>>, vector<32x128xf32>
    %cst_8 = arith.constant dense<0.000000e+00> : vector<8x128xf32>
    %9 = tpu.matmul %7, %8, %cst_8 {dimension_numbers = #tpu.dot_dimension_numbers<[1], [0], [0], [1], [0, 0, 1, 1], [], []>} : vector<8x32xf32>, vector<32x128xf32>, vector<8x128xf32> -> vector<8x128xf32>
    %c0_9 = arith.constant 0 : index
    %c0_10 = arith.constant 0 : index
    %10 = vector.load %arg5[%c0_9, %c0_10] : memref<1x128xf32, #tpu.memory_space<vmem>>, vector<1x128xf32>
    %11 = vector.broadcast %10 : vector<1x128xf32> to vector<8x128xf32>
    %12 = arith.addf %9, %11 : vector<8x128xf32>
    %c0_11 = arith.constant 0 : index
    %c0_12 = arith.constant 0 : index
    %13 = vector.load %arg6[%c0_11, %c0_12] : memref<8x128xf32, #tpu.memory_space<vmem>>, vector<8x128xf32>
    tpu.vector_store %arg6[%c0_11, %c0_12], %12 {strides = array<i32>} : memref<8x128xf32, #tpu.memory_space<vmem>>, vector<8x128xf32>,
    return
  }
  func.func @transform_0(%arg0: i32) -> (i32, i32) {
    %c0_i32 = arith.constant 0 : i32
    %c0_i32_0 = arith.constant 0 : i32
    return %arg0, %c0_i32 : i32, i32
  }
  func.func @transform_1(%arg0: i32) -> (i32, i32) {
    %c0_i32 = arith.constant 0 : i32
    %c0_i32_0 = arith.constant 0 : i32
    %c0_i32_1 = arith.constant 0 : i32
    return %c0_i32, %c0_i32_0 : i32, i32
  }
  func.func @transform_2(%arg0: i32) -> (i32, i32) {
    %c0_i32 = arith.constant 0 : i32
    %c0_i32_0 = arith.constant 0 : i32
    %c0_i32_1 = arith.constant 0 : i32
    return %c0_i32, %c0_i32_0 : i32, i32
  }
  func.func @transform_3(%arg0: i32) -> (i32, i32) {
    %c0_i32 = arith.constant 0 : i32
    %c0_i32_0 = arith.constant 0 : i32
    %c0_i32_1 = arith.constant 0 : i32
    return %c0_i32, %c0_i32_0 : i32, i32
  }
  func.func @transform_4(%arg0: i32) -> (i32, i32) {
    %c0_i32 = arith.constant 0 : i32
    %c0_i32_0 = arith.constant 0 : i32
    %c0_i32_1 = arith.constant 0 : i32
    return %c0_i32, %c0_i32_0 : i32, i32
  }
  func.func @transform_5(%arg0: i32) -> (i32, i32) {
    %c0_i32 = arith.constant 0 : i32
    %c0_i32_0 = arith.constant 0 : i32
    return %arg0, %c0_i32 : i32, i32
  }
}

</mosaic_0001>

<llo_original>
// kernel: tpu_custom_call.1
$region0: #{tpu_custom_call.1}
  #allocation0 [shape = 'u32[]', space=smem, size = 0x4, offset = 0x4, fixed_abs, tag = 'smem constant byte address 0x4 - core index']
  #allocation1 [shape = 'u32[144,128]{1,0:T(1,128)}', space=vmem, size = 0x12000, scoped, tag = 'internal scratch']
  %s0 = inlined_call_operand.hbm [shape: f32[8,32], index: 0, kind: input, shape index: {}]
  %s1 = inlined_call_operand.hbm [shape: f32[32,32], index: 1, kind: input, shape index: {}]
  %s2 = inlined_call_operand.hbm [shape: f32[1,32], index: 2, kind: input, shape index: {}]
  %s3 = inlined_call_operand.hbm [shape: f32[32,128], index: 3, kind: input, shape index: {}]
  %s4 = inlined_call_operand.hbm [shape: f32[1,128], index: 4, kind: input, shape index: {}]
  %s5 = inlined_call_operand.hbm [shape: f32[8,128], index: 5, kind: output, shape index: {}]
  %s6 = sld [smem:[#allocation0]]
  $region50: #{tpu_custom_call.1} parent=0
    _
  %s8 = ssub.s32 1, %s6
  %s9 = scalar_select 0, %s8, %s6
  $region1: #{tpu_custom_call.1} parent=0
    #allocation2 [shape = 'u8[4096]{0}', space=vmem, size = 0x1000, scoped, tag = 'input window, operand 0, single buffered']
    #allocation3 [shape = 's32[1]{0}', space=sflag, size = 0x4, scoped, tag = 'scoped memory for tpu_custom_call.1']
    #allocation4 [shape = 's32[1]{0}', space=sflag, size = 0x4, scoped, tag = 'scoped memory for tpu_custom_call.1']
    #allocation5 [shape = 'u8[16384]{0}', space=vmem, size = 0x4000, scoped, tag = 'input window, operand 1, single buffered']
    #allocation6 [shape = 's32[1]{0}', space=sflag, size = 0x4, scoped, tag = 'scoped memory for tpu_custom_call.1']
    #allocation7 [shape = 'u8[512]{0}', space=vmem, size = 0x400, scoped, tag = 'input window, operand 2, single buffered']
    #allocation8 [shape = 'u8[16384]{0}', space=vmem, size = 0x4000, scoped, tag = 'input window, operand 3, single buffered']
    #allocation9 [shape = 's32[1]{0}', space=sflag, size = 0x4, scoped, tag = 'scoped memory for tpu_custom_call.1']
    #allocation10 [shape = 'u8[512]{0}', space=vmem, size = 0x400, scoped, tag = 'input window, operand 4, single buffered']
    #allocation11 [shape = 'u8[4096]{0}', space=vmem, size = 0x1000, scoped, tag = 'output window, operand 0, single buffered']
    %10 = vsyncpa [#allocation3], 0
    %11 = vsyncpa [#allocation6], 0
    %12 = vsyncpa [#allocation9], 0
    %13 = vsyncpa [#allocation4], 0
    // Predicated region
    $region2: #{tpu_custom_call.1} parent=1 // pred_check
      _
    $region3: #{tpu_custom_call.1} parent=1 // pred_check_branch
      %15 = sbr.rel (0) target = $region5
    $region4: #{tpu_custom_call.1} parent=1 // pred_region
      %s17 = ssub.s32 128, 128
      %18 = vsyncadd [#allocation3], %s17
      %s20 = sshll.u32 [#allocation2], 4
      %s21 = int_to_ptr.vmem [resolvable:$true] %s20
      %23 = dma.hbm_to_vmem [thread:$0]  %s0, 128, %s21, [#allocation3]
    $region5: #{tpu_custom_call.1} parent=1 // pred_fallthru
      _
    // Predicated region
    $region6: #{tpu_custom_call.1} parent=1 // pred_check
      _
    $region7: #{tpu_custom_call.1} parent=1 // pred_check_branch
      %25 = sbr.rel (0) target = $region9
    $region8: #{tpu_custom_call.1} parent=1 // pred_region
      %s27 = ssub.s32 512, 512
      %28 = vsyncadd [#allocation6], %s27
      %s29 = sshll.u32 [#allocation5], 4
      %s30 = int_to_ptr.vmem [resolvable:$true] %s29
      %35 = dma.hbm_to_vmem [thread:$0]  %s1, 512, %s30, [#allocation6], 128, 128, 8
    $region9: #{tpu_custom_call.1} parent=1 // pred_fallthru
      _
    // Predicated region
    $region10: #{tpu_custom_call.1} parent=1 // pred_check
      _
    $region11: #{tpu_custom_call.1} parent=1 // pred_check_branch
      %37 = sbr.rel (0) target = $region13
    $region12: #{tpu_custom_call.1} parent=1 // pred_region
      %s39 = ssub.s32 16, 16
      %40 = vsyncadd [#allocation6], %s39
      %s42 = sshll.u32 [#allocation7], 4
      %s43 = int_to_ptr.vmem [resolvable:$true] %s42
      %45 = dma.hbm_to_vmem [thread:$0]  %s2, 16, %s43, [#allocation6]
    $region13: #{tpu_custom_call.1} parent=1 // pred_fallthru
      _
    // Predicated region
    $region14: #{tpu_custom_call.1} parent=1 // pred_check
      _
    $region15: #{tpu_custom_call.1} parent=1 // pred_check_branch
      %47 = sbr.rel (0) target = $region17
    $region16: #{tpu_custom_call.1} parent=1 // pred_region
      %s49 = ssub.s32 512, 512
      %50 = vsyncadd [#allocation9], %s49
      %s51 = sshll.u32 [#allocation8], 4
      %s52 = int_to_ptr.vmem [resolvable:$true] %s51
      %57 = dma.hbm_to_vmem [thread:$0]  %s3, 512, %s52, [#allocation9], 128, 128, 8
    $region17: #{tpu_custom_call.1} parent=1 // pred_fallthru
      _
    // Predicated region
    $region18: #{tpu_custom_call.1} parent=1 // pred_check
      _
    $region19: #{tpu_custom_call.1} parent=1 // pred_check_branch
      %59 = sbr.rel (0) target = $region21
    $region20: #{tpu_custom_call.1} parent=1 // pred_region
      %s61 = ssub.s32 16, 16
      %62 = vsyncadd [#allocation9], %s61
      %s64 = sshll.u32 [#allocation10], 4
      %s65 = int_to_ptr.vmem [resolvable:$true] %s64
      %67 = dma.hbm_to_vmem [thread:$0]  %s4, 16, %s65, [#allocation9]
    $region21: #{tpu_custom_call.1} parent=1 // pred_fallthru
      _
    // Predicated region
    $region22: #{tpu_custom_call.1} parent=1 // pred_check
      _
    $region23: #{tpu_custom_call.1} parent=1 // pred_check_branch
      %69 = sbr.rel (0) target = $region25
    $region24: #{tpu_custom_call.1} parent=1 // pred_region
      %70 = dma.done [#allocation3], 128
    $region25: #{tpu_custom_call.1} parent=1 // pred_fallthru
      _
    // Predicated region
    $region26: #{tpu_custom_call.1} parent=1 // pred_check
      _
    $region27: #{tpu_custom_call.1} parent=1 // pred_check_branch
      %72 = sbr.rel (0) target = $region29
    $region28: #{tpu_custom_call.1} parent=1 // pred_region
      %73 = dma.done [#allocation6], 512
    $region29: #{tpu_custom_call.1} parent=1 // pred_fallthru
      _
    // Predicated region
    $region30: #{tpu_custom_call.1} parent=1 // pred_check
      _
    $region31: #{tpu_custom_call.1} parent=1 // pred_check_branch
      %75 = sbr.rel (0) target = $region33
    $region32: #{tpu_custom_call.1} parent=1 // pred_region
      %76 = dma.done [#allocation6], 16
    $region33: #{tpu_custom_call.1} parent=1 // pred_fallthru
      _
    // Predicated region
    $region34: #{tpu_custom_call.1} parent=1 // pred_check
      _
    $region35: #{tpu_custom_call.1} parent=1 // pred_check_branch
      %78 = sbr.rel (0) target = $region37
    $region36: #{tpu_custom_call.1} parent=1 // pred_region
      %79 = dma.done [#allocation9], 512
    $region37: #{tpu_custom_call.1} parent=1 // pred_fallthru
      _
    // Predicated region
    $region38: #{tpu_custom_call.1} parent=1 // pred_check
      _
    $region39: #{tpu_custom_call.1} parent=1 // pred_check_branch
      %81 = sbr.rel (0) target = $region41
    $region40: #{tpu_custom_call.1} parent=1 // pred_region
      %82 = dma.done [#allocation9], 16
    $region41: #{tpu_custom_call.1} parent=1 // pred_fallthru
      _
    %v83 = vld [vmem:[#allocation2] sm:$0xff]
    %v84 = vld [vmem:[#allocation5] sm:$0xff]
    %v85 = vld [vmem:[#allocation5 + $0x8] sm:$0xff]
    %v86 = vld [vmem:[#allocation5 + $0x10] sm:$0xff]
    %v87 = vld [vmem:[#allocation5 + $0x18] sm:$0xff]
    %v88 = vld [vmem:[#allocation7] sm:$0x1]
    %v90 = vlaneseq
    %v91 = vshrl.u32 %v90, 7
    %v92 = vsub.s32 0, %v91
    %v93 = vrot.slane %v88, %v92
    %vm95 = vcmask 261120
    %v97 = vsel %vm95, %v83, 0
    %99 = vmatprep.subr.mxu0 0.0
    %100 = vmatpush1.msra.mxu0 %v84
    %101 = vmatprep.subr.mxu0 0.0
    %102 = vmatpush1.msra.mxu0 %v85
    %103 = vmatprep.subr.mxu0 0.0
    %104 = vmatpush1.msra.mxu0 %v86
    %105 = vmatprep.subr.mxu0 0.0
    %106 = vmatpush1.msra.mxu0 %v87
    %107 = vmatprep.subr.mxu0 0.0
    %108 = vmatpush1.msra.mxu0 0.0
    %109 = vmatprep.subr.mxu0 0.0
    %110 = vmatpush1.msra.mxu0 0.0
    %111 = vmatprep.subr.mxu0 0.0
    %112 = vmatpush1.msra.mxu0 0.0
    %113 = vmatprep.subr.mxu0 0.0
    %114 = vmatpush1.msra.mxu0 0.0
    %115 = vmatprep.subr.mxu0 0.0
    %116 = vmatpush1.msra.mxu0 0.0
    %117 = vmatprep.subr.mxu0 0.0
    %118 = vmatpush1.msra.mxu0 0.0
    %119 = vmatprep.subr.mxu0 0.0
    %120 = vmatpush1.msra.mxu0 0.0
    %121 = vmatprep.subr.mxu0 0.0
    %122 = vmatpush1.msra.mxu0 0.0
    %123 = vmatprep.subr.mxu0 0.0
    %124 = vmatpush1.msra.mxu0 0.0
    %125 = vmatprep.subr.mxu0 0.0
    %126 = vmatpush1.msra.mxu0 0.0
    %127 = vmatprep.subr.mxu0 0.0
    %128 = vmatpush1.msra.mxu0 0.0
    %129 = vmatprep.subr.mxu0 0.0
    %130 = vmatpush1.msra.mxu0 0.0
    %131 = vmatprep.subr.mxu0 0.0
    %132 = vmatpush1.msra.mxu0 0.0
    %133 = vmatprep.subr.mxu0 0.0
    %134 = vmatpush1.msra.mxu0 0.0
    %135 = vmatprep.subr.mxu0 0.0
    %136 = vmatpush1.msra.mxu0 0.0
    %137 = vmatprep.subr.mxu0 0.0
    %138 = vmatpush1.msra.mxu0 0.0
    %139 = vmatprep.subr.mxu0 0.0
    %140 = vmatpush1.msra.mxu0 0.0
    %141 = vmatprep.subr.mxu0 0.0
    %142 = vmatpush1.msra.mxu0 0.0
    %143 = vmatprep.subr.mxu0 0.0
    %144 = vmatpush1.msra.mxu0 0.0
    %145 = vmatprep.subr.mxu0 0.0
    %146 = vmatpush1.msra.mxu0 0.0
    %147 = vmatprep.subr.mxu0 0.0
    %148 = vmatpush1.msra.mxu0 0.0
    %149 = vmatprep.subr.mxu0 0.0
    %150 = vmatpush1.msra.mxu0 0.0
    %151 = vmatprep.subr.mxu0 0.0
    %152 = vmatpush1.msra.mxu0 0.0
    %153 = vmatprep.subr.mxu0 0.0
    %154 = vmatpush1.msra.mxu0 0.0
    %155 = vmatprep.subr.mxu0 0.0
    %156 = vmatpush1.msra.mxu0 0.0
    %157 = vmatprep.subr.mxu0 0.0
    %158 = vmatpush1.msra.mxu0 0.0
    %159 = vmatprep.subr.mxu0 0.0
    %160 = vmatpush1.msra.mxu0 0.0
    %161 = vmatprep.subr.mxu0 0.0
    %162 = vmatpush1.msra.mxu0 0.0
    %163 = vmatprep.mubr.f32.mxu0 0.0
    %164 = vmatmul.mubr.f32.gmra.mrb[0].mxu0 %v97
    %v165 = vpop.f32.mrb[0].mxu0
    %v166 = vadd.f32 %v93, %v165
    %v167 = vpop.f32.mrb[0].mxu0
    %168 = vdwg.mxu0
    %v169 = vmax.f32 %v166, 0.0
    %v170 = vld [vmem:[#allocation8] sm:$0xff]
    %v171 = vld [vmem:[#allocation8 + $0x8] sm:$0xff]
    %v172 = vld [vmem:[#allocation8 + $0x10] sm:$0xff]
    %v173 = vld [vmem:[#allocation8 + $0x18] sm:$0xff]
    %v174 = vld [vmem:[#allocation10] sm:$0x1]
    %v176 = vlaneseq
    %v177 = vshrl.u32 %v176, 7
    %v178 = vsub.s32 0, %v177
    %v179 = vrot.slane %v174, %v178
    %v182 = vsel %vm95, %v169, 0
    %184 = vmatprep.subr.mxu0 0.0
    %185 = vmatpush1.msra.mxu0 %v170
    %186 = vmatprep.subr.mxu0 0.0
    %187 = vmatpush1.msra.mxu0 %v171
    %188 = vmatprep.subr.mxu0 0.0
    %189 = vmatpush1.msra.mxu0 %v172
    %190 = vmatprep.subr.mxu0 0.0
    %191 = vmatpush1.msra.mxu0 %v173
    %192 = vmatprep.subr.mxu0 0.0
    %193 = vmatpush1.msra.mxu0 0.0
    %194 = vmatprep.subr.mxu0 0.0
    %195 = vmatpush1.msra.mxu0 0.0
    %196 = vmatprep.subr.mxu0 0.0
    %197 = vmatpush1.msra.mxu0 0.0
    %198 = vmatprep.subr.mxu0 0.0
    %199 = vmatpush1.msra.mxu0 0.0
    %200 = vmatprep.subr.mxu0 0.0
    %201 = vmatpush1.msra.mxu0 0.0
    %202 = vmatprep.subr.mxu0 0.0
    %203 = vmatpush1.msra.mxu0 0.0
    %204 = vmatprep.subr.mxu0 0.0
    %205 = vmatpush1.msra.mxu0 0.0
    %206 = vmatprep.subr.mxu0 0.0
    %207 = vmatpush1.msra.mxu0 0.0
    %208 = vmatprep.subr.mxu0 0.0
    %209 = vmatpush1.msra.mxu0 0.0
    %210 = vmatprep.subr.mxu0 0.0
    %211 = vmatpush1.msra.mxu0 0.0
    %212 = vmatprep.subr.mxu0 0.0
    %213 = vmatpush1.msra.mxu0 0.0
    %214 = vmatprep.subr.mxu0 0.0
    %215 = vmatpush1.msra.mxu0 0.0
    %216 = vmatprep.subr.mxu0 0.0
    %217 = vmatpush1.msra.mxu0 0.0
    %218 = vmatprep.subr.mxu0 0.0
    %219 = vmatpush1.msra.mxu0 0.0
    %220 = vmatprep.subr.mxu0 0.0
    %221 = vmatpush1.msra.mxu0 0.0
    %222 = vmatprep.subr.mxu0 0.0
    %223 = vmatpush1.msra.mxu0 0.0
    %224 = vmatprep.subr.mxu0 0.0
    %225 = vmatpush1.msra.mxu0 0.0
    %226 = vmatprep.subr.mxu0 0.0
    %227 = vmatpush1.msra.mxu0 0.0
    %228 = vmatprep.subr.mxu0 0.0
    %229 = vmatpush1.msra.mxu0 0.0
    %230 = vmatprep.subr.mxu0 0.0
    %231 = vmatpush1.msra.mxu0 0.0
    %232 = vmatprep.subr.mxu0 0.0
    %233 = vmatpush1.msra.mxu0 0.0
    %234 = vmatprep.subr.mxu0 0.0
    %235 = vmatpush1.msra.mxu0 0.0
    %236 = vmatprep.subr.mxu0 0.0
    %237 = vmatpush1.msra.mxu0 0.0
    %238 = vmatprep.subr.mxu0 0.0
    %239 = vmatpush1.msra.mxu0 0.0
    %240 = vmatprep.subr.mxu0 0.0
    %241 = vmatpush1.msra.mxu0 0.0
    %242 = vmatprep.subr.mxu0 0.0
    %243 = vmatpush1.msra.mxu0 0.0
    %244 = vmatprep.subr.mxu0 0.0
    %245 = vmatpush1.msra.mxu0 0.0
    %246 = vmatprep.subr.mxu0 0.0
    %247 = vmatpush1.msra.mxu0 0.0
    %248 = vmatprep.mubr.f32.mxu0 0.0
    %249 = vmatmul.mubr.f32.gmra.mrb[0].mxu0 %v182
    %v250 = vpop.f32.mrb[0].mxu0
    %v251 = vadd.f32 %v179, %v250
    %v252 = vpop.f32.mrb[0].mxu0
    %253 = vdwg.mxu0
    %254 = vst [vmem:[#allocation11] sm:$0xff] %v251
    // Predicated region
    $region42: #{tpu_custom_call.1} parent=1 // pred_check
      _
    $region43: #{tpu_custom_call.1} parent=1 // pred_check_branch
      %256 = sbr.rel (0) target = $region45
    $region44: #{tpu_custom_call.1} parent=1 // pred_region
      %s258 = ssub.s32 128, 128
      %259 = vsyncadd [#allocation4], %s258
      %s261 = sshll.u32 [#allocation11], 4
      %s262 = int_to_ptr.vmem [resolvable:$true] %s261
      %264 = dma.vmem_to_hbm [thread:$0]  %s262, 128, %s5, [#allocation4]
    $region45: #{tpu_custom_call.1} parent=1 // pred_fallthru
      _
    // Predicated region
    $region46: #{tpu_custom_call.1} parent=1 // pred_check
      _
    $region47: #{tpu_custom_call.1} parent=1 // pred_check_branch
      %266 = sbr.rel (0) target = $region49
    $region48: #{tpu_custom_call.1} parent=1 // pred_region
      %267 = dma.done [#allocation4], 128
    $region49: #{tpu_custom_call.1} parent=1 // pred_fallthru
      _
    %268 = vsyncpa [#allocation3], 1
    %269 = vsyncpa [#allocation6], 1
    %270 = vsyncpa [#allocation9], 1
    %271 = vsyncpa [#allocation4], 1

// kernel: tpu_custom_call.1
$region0: #{tpu_custom_call.1}
  #allocation0 [shape = 'u32[]', space=smem, size = 0x4, offset = 0x4, fixed_abs, tag = 'smem constant byte address 0x4 - core index']
  #allocation1 [shape = 'u32[144,128]{1,0:T(1,128)}', space=vmem, size = 0x12000, scoped, tag = 'internal scratch']
  %s0 = inlined_call_operand.hbm [shape: f32[8,32], index: 0, kind: input, shape index: {}]
  %s1 = inlined_call_operand.hbm [shape: f32[32,32], index: 1, kind: input, shape index: {}]
  %s2 = inlined_call_operand.hbm [shape: f32[1,32], index: 2, kind: input, shape index: {}]
  %s3 = inlined_call_operand.hbm [shape: f32[32,128], index: 3, kind: input, shape index: {}]
  %s4 = inlined_call_operand.hbm [shape: f32[1,128], index: 4, kind: input, shape index: {}]
  %s5 = inlined_call_operand.hbm [shape: f32[8,128], index: 5, kind: output, shape index: {}]
  %s6 = sld [smem:[#allocation0]]
  $region50: #{tpu_custom_call.1} parent=0
    _
  %s8 = ssub.s32 1, %s6
  %s9 = scalar_select 0, %s8, %s6
  $region1: #{tpu_custom_call.1} parent=0
    #allocation2 [shape = 'u8[4096]{0}', space=vmem, size = 0x1000, scoped, tag = 'input window, operand 0, single buffered']
    #allocation3 [shape = 's32[1]{0}', space=sflag, size = 0x4, scoped, tag = 'scoped memory for tpu_custom_call.1']
    #allocation4 [shape = 's32[1]{0}', space=sflag, size = 0x4, scoped, tag = 'scoped memory for tpu_custom_call.1']
    #allocation5 [shape = 'u8[16384]{0}', space=vmem, size = 0x4000, scoped, tag = 'input window, operand 1, single buffered']
    #allocation6 [shape = 's32[1]{0}', space=sflag, size = 0x4, scoped, tag = 'scoped memory for tpu_custom_call.1']
    #allocation7 [shape = 'u8[512]{0}', space=vmem, size = 0x400, scoped, tag = 'input window, operand 2, single buffered']
    #allocation8 [shape = 'u8[16384]{0}', space=vmem, size = 0x4000, scoped, tag = 'input window, operand 3, single buffered']
    #allocation9 [shape = 's32[1]{0}', space=sflag, size = 0x4, scoped, tag = 'scoped memory for tpu_custom_call.1']
    #allocation10 [shape = 'u8[512]{0}', space=vmem, size = 0x400, scoped, tag = 'input window, operand 4, single buffered']
    #allocation11 [shape = 'u8[4096]{0}', space=vmem, size = 0x1000, scoped, tag = 'output window, operand 0, single buffered']
    %10 = vsyncpa [#allocation3], 0
    %11 = vsyncpa [#allocation6], 0
    %12 = vsyncpa [#allocation9], 0
    %13 = vsyncpa [#allocation4], 0
    // Predicated region
    $region2: #{tpu_custom_call.1} parent=1 // pred_check
      _
    $region3: #{tpu_custom_call.1} parent=1 // pred_check_branch
      %15 = sbr.rel (0) target = $region5
    $region4: #{tpu_custom_call.1} parent=1 // pred_region
      %s17 = ssub.s32 128, 128
      %18 = vsyncadd [#allocation3], %s17
      %s20 = sshll.u32 [#allocation2], 4
      %s21 = int_to_ptr.vmem [resolvable:$true] %s20
      %23 = dma.hbm_to_vmem [thread:$0]  %s0, 128, %s21, [#allocation3]
    $region5: #{tpu_custom_call.1} parent=1 // pred_fallthru
      _
    // Predicated region
    $region6: #{tpu_custom_call.1} parent=1 // pred_check
      _
    $region7: #{tpu_custom_call.1} parent=1 // pred_check_branch
      %25 = sbr.rel (0) target = $region9
    $region8: #{tpu_custom_call.1} parent=1 // pred_region
      %s27 = ssub.s32 512, 512
      %28 = vsyncadd [#allocation6], %s27
      %s29 = sshll.u32 [#allocation5], 4
      %s30 = int_to_ptr.vmem [resolvable:$true] %s29
      %35 = dma.hbm_to_vmem [thread:$0]  %s1, 512, %s30, [#allocation6], 128, 128, 8
    $region9: #{tpu_custom_call.1} parent=1 // pred_fallthru
      _
    // Predicated region
    $region10: #{tpu_custom_call.1} parent=1 // pred_check
      _
    $region11: #{tpu_custom_call.1} parent=1 // pred_check_branch
      %37 = sbr.rel (0) target = $region13
    $region12: #{tpu_custom_call.1} parent=1 // pred_region
      %s39 = ssub.s32 16, 16
      %40 = vsyncadd [#allocation6], %s39
      %s42 = sshll.u32 [#allocation7], 4
      %s43 = int_to_ptr.vmem [resolvable:$true] %s42
      %45 = dma.hbm_to_vmem [thread:$0]  %s2, 16, %s43, [#allocation6]
    $region13: #{tpu_custom_call.1} parent=1 // pred_fallthru
      _
    // Predicated region
    $region14: #{tpu_custom_call.1} parent=1 // pred_check
      _
    $region15: #{tpu_custom_call.1} parent=1 // pred_check_branch
      %47 = sbr.rel (0) target = $region17
    $region16: #{tpu_custom_call.1} parent=1 // pred_region
      %s49 = ssub.s32 512, 512
      %50 = vsyncadd [#allocation9], %s49
      %s51 = sshll.u32 [#allocation8], 4
      %s52 = int_to_ptr.vmem [resolvable:$true] %s51
      %57 = dma.hbm_to_vmem [thread:$0]  %s3, 512, %s52, [#allocation9], 128, 128, 8
    $region17: #{tpu_custom_call.1} parent=1 // pred_fallthru
      _
    // Predicated region
    $region18: #{tpu_custom_call.1} parent=1 // pred_check
      _
    $region19: #{tpu_custom_call.1} parent=1 // pred_check_branch
      %59 = sbr.rel (0) target = $region21
    $region20: #{tpu_custom_call.1} parent=1 // pred_region
      %s61 = ssub.s32 16, 16
      %62 = vsyncadd [#allocation9], %s61
      %s64 = sshll.u32 [#allocation10], 4
      %s65 = int_to_ptr.vmem [resolvable:$true] %s64
      %67 = dma.hbm_to_vmem [thread:$0]  %s4, 16, %s65, [#allocation9]
    $region21: #{tpu_custom_call.1} parent=1 // pred_fallthru
      _
    // Predicated region
    $region22: #{tpu_custom_call.1} parent=1 // pred_check
      _
    $region23: #{tpu_custom_call.1} parent=1 // pred_check_branch
      %69 = sbr.rel (0) target = $region25
    $region24: #{tpu_custom_call.1} parent=1 // pred_region
      %70 = dma.done [#allocation3], 128
    $region25: #{tpu_custom_call.1} parent=1 // pred_fallthru
      _
    // Predicated region
    $region26: #{tpu_custom_call.1} parent=1 // pred_check
      _
    $region27: #{tpu_custom_call.1} parent=1 // pred_check_branch
      %72 = sbr.rel (0) target = $region29
    $region28: #{tpu_custom_call.1} parent=1 // pred_region
      %73 = dma.done [#allocation6], 512
    $region29: #{tpu_custom_call.1} parent=1 // pred_fallthru
      _
    // Predicated region
    $region30: #{tpu_custom_call.1} parent=1 // pred_check
      _
    $region31: #{tpu_custom_call.1} parent=1 // pred_check_branch
      %75 = sbr.rel (0) target = $region33
    $region32: #{tpu_custom_call.1} parent=1 // pred_region
      %76 = dma.done [#allocation6], 16
    $region33: #{tpu_custom_call.1} parent=1 // pred_fallthru
      _
    // Predicated region
    $region34: #{tpu_custom_call.1} parent=1 // pred_check
      _
    $region35: #{tpu_custom_call.1} parent=1 // pred_check_branch
      %78 = sbr.rel (0) target = $region37
    $region36: #{tpu_custom_call.1} parent=1 // pred_region
      %79 = dma.done [#allocation9], 512
    $region37: #{tpu_custom_call.1} parent=1 // pred_fallthru
      _
    // Predicated region
    $region38: #{tpu_custom_call.1} parent=1 // pred_check
      _
    $region39: #{tpu_custom_call.1} parent=1 // pred_check_branch
      %81 = sbr.rel (0) target = $region41
    $region40: #{tpu_custom_call.1} parent=1 // pred_region
      %82 = dma.done [#allocation9], 16
    $region41: #{tpu_custom_call.1} parent=1 // pred_fallthru
      _
    %v83 = vld [vmem:[#allocation2] sm:$0xff]
    %v84 = vld [vmem:[#allocation5] sm:$0xff]
    %v85 = vld [vmem:[#allocation5 + $0x8] sm:$0xff]
    %v86 = vld [vmem:[#allocation5 + $0x10] sm:$0xff]
    %v87 = vld [vmem:[#allocation5 + $0x18] sm:$0xff]
    %v88 = vld [vmem:[#allocation7] sm:$0x1]
    %v90 = vlaneseq
    %v91 = vshrl.u32 %v90, 7
    %v92 = vsub.s32 0, %v91
    %v93 = vrot.slane %v88, %v92
    %vm95 = vcmask 261120
    %v97 = vsel %vm95, %v83, 0
    %99 = vmatprep.subr.mxu0 0.0
    %100 = vmatpush1.msra.mxu0 %v84
    %101 = vmatprep.subr.mxu0 0.0
    %102 = vmatpush1.msra.mxu0 %v85
    %103 = vmatprep.subr.mxu0 0.0
    %104 = vmatpush1.msra.mxu0 %v86
    %105 = vmatprep.subr.mxu0 0.0
    %106 = vmatpush1.msra.mxu0 %v87
    %107 = vmatprep.subr.mxu0 0.0
    %108 = vmatpush1.msra.mxu0 0.0
    %109 = vmatprep.subr.mxu0 0.0
    %110 = vmatpush1.msra.mxu0 0.0
    %111 = vmatprep.subr.mxu0 0.0
    %112 = vmatpush1.msra.mxu0 0.0
    %113 = vmatprep.subr.mxu0 0.0
    %114 = vmatpush1.msra.mxu0 0.0
    %115 = vmatprep.subr.mxu0 0.0
    %116 = vmatpush1.msra.mxu0 0.0
    %117 = vmatprep.subr.mxu0 0.0
    %118 = vmatpush1.msra.mxu0 0.0
    %119 = vmatprep.subr.mxu0 0.0
    %120 = vmatpush1.msra.mxu0 0.0
    %121 = vmatprep.subr.mxu0 0.0
    %122 = vmatpush1.msra.mxu0 0.0
    %123 = vmatprep.subr.mxu0 0.0
    %124 = vmatpush1.msra.mxu0 0.0
    %125 = vmatprep.subr.mxu0 0.0
    %126 = vmatpush1.msra.mxu0 0.0
    %127 = vmatprep.subr.mxu0 0.0
    %128 = vmatpush1.msra.mxu0 0.0
    %129 = vmatprep.subr.mxu0 0.0
    %130 = vmatpush1.msra.mxu0 0.0
    %131 = vmatprep.subr.mxu0 0.0
    %132 = vmatpush1.msra.mxu0 0.0
    %133 = vmatprep.subr.mxu0 0.0
    %134 = vmatpush1.msra.mxu0 0.0
    %135 = vmatprep.subr.mxu0 0.0
    %136 = vmatpush1.msra.mxu0 0.0
    %137 = vmatprep.subr.mxu0 0.0
    %138 = vmatpush1.msra.mxu0 0.0
    %139 = vmatprep.subr.mxu0 0.0
    %140 = vmatpush1.msra.mxu0 0.0
    %141 = vmatprep.subr.mxu0 0.0
    %142 = vmatpush1.msra.mxu0 0.0
    %143 = vmatprep.subr.mxu0 0.0
    %144 = vmatpush1.msra.mxu0 0.0
    %145 = vmatprep.subr.mxu0 0.0
    %146 = vmatpush1.msra.mxu0 0.0
    %147 = vmatprep.subr.mxu0 0.0
    %148 = vmatpush1.msra.mxu0 0.0
    %149 = vmatprep.subr.mxu0 0.0
    %150 = vmatpush1.msra.mxu0 0.0
    %151 = vmatprep.subr.mxu0 0.0
    %152 = vmatpush1.msra.mxu0 0.0
    %153 = vmatprep.subr.mxu0 0.0
    %154 = vmatpush1.msra.mxu0 0.0
    %155 = vmatprep.subr.mxu0 0.0
    %156 = vmatpush1.msra.mxu0 0.0
    %157 = vmatprep.subr.mxu0 0.0
    %158 = vmatpush1.msra.mxu0 0.0
    %159 = vmatprep.subr.mxu0 0.0
    %160 = vmatpush1.msra.mxu0 0.0
    %161 = vmatprep.subr.mxu0 0.0
    %162 = vmatpush1.msra.mxu0 0.0
    %163 = vmatprep.mubr.f32.mxu0 0.0
    %164 = vmatmul.mubr.f32.gmra.mrb[0].mxu0 %v97
    %v165 = vpop.f32.mrb[0].mxu0
    %v166 = vadd.f32 %v93, %v165
    %v167 = vpop.f32.mrb[0].mxu0
    %168 = vdwg.mxu0
    %v169 = vmax.f32 %v166, 0.0
    %v170 = vld [vmem:[#allocation8] sm:$0xff]
    %v171 = vld [vmem:[#allocation8 + $0x8] sm:$0xff]
    %v172 = vld [vmem:[#allocation8 + $0x10] sm:$0xff]
    %v173 = vld [vmem:[#allocation8 + $0x18] sm:$0xff]
    %v174 = vld [vmem:[#allocation10] sm:$0x1]
    %v176 = vlaneseq
    %v177 = vshrl.u32 %v176, 7
    %v178 = vsub.s32 0, %v177
    %v179 = vrot.slane %v174, %v178
    %v182 = vsel %vm95, %v169, 0
    %184 = vmatprep.subr.mxu0 0.0
    %185 = vmatpush1.msra.mxu0 %v170
    %186 = vmatprep.subr.mxu0 0.0
    %187 = vmatpush1.msra.mxu0 %v171
    %188 = vmatprep.subr.mxu0 0.0
    %189 = vmatpush1.msra.mxu0 %v172
    %190 = vmatprep.subr.mxu0 0.0
    %191 = vmatpush1.msra.mxu0 %v173
    %192 = vmatprep.subr.mxu0 0.0
    %193 = vmatpush1.msra.mxu0 0.0
    %194 = vmatprep.subr.mxu0 0.0
    %195 = vmatpush1.msra.mxu0 0.0
    %196 = vmatprep.subr.mxu0 0.0
    %197 = vmatpush1.msra.mxu0 0.0
    %198 = vmatprep.subr.mxu0 0.0
    %199 = vmatpush1.msra.mxu0 0.0
    %200 = vmatprep.subr.mxu0 0.0
    %201 = vmatpush1.msra.mxu0 0.0
    %202 = vmatprep.subr.mxu0 0.0
    %203 = vmatpush1.msra.mxu0 0.0
    %204 = vmatprep.subr.mxu0 0.0
    %205 = vmatpush1.msra.mxu0 0.0
    %206 = vmatprep.subr.mxu0 0.0
    %207 = vmatpush1.msra.mxu0 0.0
    %208 = vmatprep.subr.mxu0 0.0
    %209 = vmatpush1.msra.mxu0 0.0
    %210 = vmatprep.subr.mxu0 0.0
    %211 = vmatpush1.msra.mxu0 0.0
    %212 = vmatprep.subr.mxu0 0.0
    %213 = vmatpush1.msra.mxu0 0.0
    %214 = vmatprep.subr.mxu0 0.0
    %215 = vmatpush1.msra.mxu0 0.0
    %216 = vmatprep.subr.mxu0 0.0
    %217 = vmatpush1.msra.mxu0 0.0
    %218 = vmatprep.subr.mxu0 0.0
    %219 = vmatpush1.msra.mxu0 0.0
    %220 = vmatprep.subr.mxu0 0.0
    %221 = vmatpush1.msra.mxu0 0.0
    %222 = vmatprep.subr.mxu0 0.0
    %223 = vmatpush1.msra.mxu0 0.0
    %224 = vmatprep.subr.mxu0 0.0
    %225 = vmatpush1.msra.mxu0 0.0
    %226 = vmatprep.subr.mxu0 0.0
    %227 = vmatpush1.msra.mxu0 0.0
    %228 = vmatprep.subr.mxu0 0.0
    %229 = vmatpush1.msra.mxu0 0.0
    %230 = vmatprep.subr.mxu0 0.0
    %231 = vmatpush1.msra.mxu0 0.0
    %232 = vmatprep.subr.mxu0 0.0
    %233 = vmatpush1.msra.mxu0 0.0
    %234 = vmatprep.subr.mxu0 0.0
    %235 = vmatpush1.msra.mxu0 0.0
    %236 = vmatprep.subr.mxu0 0.0
    %237 = vmatpush1.msra.mxu0 0.0
    %238 = vmatprep.subr.mxu0 0.0
    %239 = vmatpush1.msra.mxu0 0.0
    %240 = vmatprep.subr.mxu0 0.0
    %241 = vmatpush1.msra.mxu0 0.0
    %242 = vmatprep.subr.mxu0 0.0
    %243 = vmatpush1.msra.mxu0 0.0
    %244 = vmatprep.subr.mxu0 0.0
    %245 = vmatpush1.msra.mxu0 0.0
    %246 = vmatprep.subr.mxu0 0.0
    %247 = vmatpush1.msra.mxu0 0.0
    %248 = vmatprep.mubr.f32.mxu0 0.0
    %249 = vmatmul.mubr.f32.gmra.mrb[0].mxu0 %v182
    %v250 = vpop.f32.mrb[0].mxu0
    %v251 = vadd.f32 %v179, %v250
    %v252 = vpop.f32.mrb[0].mxu0
    %253 = vdwg.mxu0
    %254 = vst [vmem:[#allocation11] sm:$0xff] %v251
    // Predicated region
    $region42: #{tpu_custom_call.1} parent=1 // pred_check
      _
    $region43: #{tpu_custom_call.1} parent=1 // pred_check_branch
      %256 = sbr.rel (0) target = $region45
    $region44: #{tpu_custom_call.1} parent=1 // pred_region
      %s258 = ssub.s32 128, 128
      %259 = vsyncadd [#allocation4], %s258
      %s261 = sshll.u32 [#allocation11], 4
      %s262 = int_to_ptr.vmem [resolvable:$true] %s261
      %264 = dma.vmem_to_hbm [thread:$0]  %s262, 128, %s5, [#allocation4]
    $region45: #{tpu_custom_call.1} parent=1 // pred_fallthru
      _
    // Predicated region
    $region46: #{tpu_custom_call.1} parent=1 // pred_check
      _
    $region47: #{tpu_custom_call.1} parent=1 // pred_check_branch
      %266 = sbr.rel (0) target = $region49
    $region48: #{tpu_custom_call.1} parent=1 // pred_region
      %267 = dma.done [#allocation4], 128
    $region49: #{tpu_custom_call.1} parent=1 // pred_fallthru
      _
    %268 = vsyncpa [#allocation3], 1
    %269 = vsyncpa [#allocation6], 1
    %270 = vsyncpa [#allocation9], 1
    %271 = vsyncpa [#allocation4], 1

</llo_original>
